<compile_context>
chip_gen: v7x
topology: tpu7x:2x2x1
jax: 0.10.0
libtpu: 0.0.40
codegen_flags: <defaults>
</compile_context>

<pallas_src>
import jax
import jax.numpy as jnp
from jax.experimental import pallas as pl
from jax.experimental.pallas import tpu as pltpu


def link_pred_kernel(idx_ref, x_track_hbm, x_playlist_hbm, out_ref,
                     tbuf, pbuf, sems):
    # idx_ref        : SMEM (2, E_pad) int32  -- row 0 track ids, row 1 playlist ids
    # x_track_hbm    : HBM  (Nt, D)
    # x_playlist_hbm : HBM  (Np, D)
    # out_ref        : VMEM (1, 1, TE) float32
    # tbuf, pbuf     : VMEM (TE, D) gather buffers
    # sems           : DMA semaphores, shape (2,)
    te = tbuf.shape[0]
    base = pl.program_id(0) * te

    # Issue one row DMA per edge endpoint (HBM -> VMEM gather).
    @pl.loop(0, te)
    def _(e):
        ti = idx_ref[0, base + e]
        pi = idx_ref[1, base + e]
        pltpu.make_async_copy(x_track_hbm.at[ti], tbuf.at[e], sems.at[0]).start()
        pltpu.make_async_copy(x_playlist_hbm.at[pi], pbuf.at[e], sems.at[1]).start()

    # Drain: all row copies per table share one semaphore and have identical sizes,
    # so one wait per issued copy is sufficient.
    @pl.loop(0, te)
    def _(e):
        pltpu.make_async_copy(x_track_hbm.at[0], tbuf.at[e], sems.at[0]).wait()
        pltpu.make_async_copy(x_playlist_hbm.at[0], pbuf.at[e], sems.at[1]).wait()

    # Per-edge dot product: VPU multiply + XLU reduce over the feature axis.
    prod = tbuf[...].astype(jnp.float32) * pbuf[...].astype(jnp.float32)
    scores = jnp.sum(prod, axis=-1)                       # (TE,)
    out_ref[...] = scores.reshape(1, 1, te).astype(out_ref.dtype)


def link_predictor(x_track, x_playlist, track_playlist_edge, *, edge_tile=128):
    """Pallas equivalent of LinkPredictor.forward: (x_track[e0] * x_playlist[e1]).sum(-1)."""
    E = track_playlist_edge.shape[1]
    D = x_track.shape[1]
    num_tiles = pl.cdiv(E, edge_tile)
    e_pad = num_tiles * edge_tile

    # Pad edge indices to whole tiles; pad value 0 is always a valid row, padded
    # scores are discarded below.
    idx = jnp.zeros((2, e_pad), dtype=jnp.int32)
    idx = idx.at[:, :E].set(track_playlist_edge.astype(jnp.int32))

    grid_spec = pltpu.PrefetchScalarGridSpec(
        num_scalar_prefetch=1,                   # idx -> SMEM
        grid=(num_tiles,),
        in_specs=[
            pl.BlockSpec(memory_space=pl.ANY),   # x_track stays in HBM (DMA-gathered)
            pl.BlockSpec(memory_space=pl.ANY),   # x_playlist stays in HBM
        ],
        out_specs=pl.BlockSpec((1, 1, edge_tile), lambda g, idx_ref: (g, 0, 0)),
        scratch_shapes=[
            pltpu.VMEM((edge_tile, D), x_track.dtype),
            pltpu.VMEM((edge_tile, D), x_playlist.dtype),
            pltpu.SemaphoreType.DMA((2,)),
        ],
    )

    itemsize = jnp.dtype(x_track.dtype).itemsize
    cost = pl.CostEstimate(
        flops=2 * e_pad * D,
        transcendentals=0,
        bytes_accessed=2 * e_pad * D * itemsize + 2 * e_pad * 4 + e_pad * 4,
    )

    out = pl.pallas_call(
        link_pred_kernel,
        out_shape=jax.ShapeDtypeStruct((num_tiles, 1, edge_tile), jnp.float32),
        grid_spec=grid_spec,
        compiler_params=pltpu.CompilerParams(
            dimension_semantics=("parallel",),    # independent edge tiles -> 2 TCs on v7x
            vmem_limit_bytes=32 * 1024 * 1024,    # scratch use is tiny; explicit budget (v7x-safe)
        ),
        cost_estimate=cost,
    )(idx, x_track, x_playlist)

    return out.reshape(-1)[:E]


if __name__ == "__main__":
    key = jax.random.PRNGKey(0)
    k1, k2, k3, k4 = jax.random.split(key, 4)

    # Small but non-trivial shapes: ragged edge count exercises tile padding.
    num_tracks, num_playlists, D, E = 200, 150, 128, 300

    x_track = jax.random.normal(k1, (num_tracks, D), dtype=jnp.float32)
    x_playlist = jax.random.normal(k2, (num_playlists, D), dtype=jnp.float32)
    track_idx = jax.random.randint(k3, (E,), 0, num_tracks, dtype=jnp.int32)
    playlist_idx = jax.random.randint(k4, (E,), 0, num_playlists, dtype=jnp.int32)
    track_playlist_edge = jnp.stack([track_idx, playlist_idx], axis=0)  # (2, E)

    out = jax.block_until_ready(link_predictor(x_track, x_playlist, track_playlist_edge))

    # Correctness check against the pure-JAX reference of the PyTorch forward.
    ref = jnp.sum(x_track[track_playlist_edge[0]] * x_playlist[track_playlist_edge[1]],
                  axis=-1)
    assert out.shape == (E,)
    assert jnp.allclose(out, ref, atol=1e-4, rtol=1e-4)

    print("KERNEL_OK")
</pallas_src>

<mosaic_0001>
module attributes {stable_mosaic.version = 11 : i64} {
  func.func @link_pred_kernel(%arg0: i32, %arg1: memref<2x384xi32, #tpu.memory_space<smem>>, %arg2: memref<200x128xf32, #tpu.memory_space<any>>, %arg3: memref<150x128xf32, #tpu.memory_space<any>>, %arg4: memref<1x1x128xf32, #tpu.memory_space<vmem>>, %arg5: memref<128x128xf32, #tpu.memory_space<vmem>>, %arg6: memref<128x128xf32, #tpu.memory_space<vmem>>, %arg7: memref<2x!tpu.dma_semaphore, #tpu.memory_space<semaphore_mem>>) attributes {dimension_semantics = [#tpu.dimension_semantics<parallel>], iteration_bounds = array<i64: 3>, scalar_prefetch = 1 : i64, scratch_operands = 3 : i64, tpu.core_type = #tpu.core_type<tc>, window_params = [{}, {}, {transform_indices = @transform_2, window_bounds = array<i64: 1, 1, 128>}]} {
    %c128_i32 = arith.constant 128 : i32
    %0 = arith.muli %arg0, %c128_i32 : i32
    %c0_i32 = arith.constant 0 : i32
    %c128_i32_0 = arith.constant 128 : i32
    %1 = arith.addi %c0_i32, %c128_i32_0 : i32
    %c1_i32 = arith.constant 1 : i32
    scf.for %arg8 = %c0_i32 to %1 step %c1_i32  : i32 {
      %c1_i32_12 = arith.constant 1 : i32
      %9 = arith.muli %arg8, %c1_i32_12 : i32
      %c0_i32_13 = arith.constant 0 : i32
      %10 = arith.addi %c0_i32_13, %9 : i32
      %11 = arith.addi %0, %10 : i32
      %c0_14 = arith.constant 0 : index
      %12 = arith.index_cast %11 : i32 to index
      %13 = memref.load %arg1[%c0_14, %12] : memref<2x384xi32, #tpu.memory_space<smem>>
      %14 = arith.addi %0, %10 : i32
      %c1 = arith.constant 1 : index
      %15 = arith.index_cast %14 : i32 to index
      %16 = memref.load %arg1[%c1, %15] : memref<2x384xi32, #tpu.memory_space<smem>>
      %c0_i32_15 = arith.constant 0 : i32
      %c0_i32_16 = arith.constant 0 : i32
      %17 = tpu.memref_slice %arg2[%13, %c0_i32_16] : memref<200x128xf32, #tpu.memory_space<any>> -> memref<1x128xf32, #tpu.memory_space<any>>
      %18 = tpu.memref_squeeze %17 : memref<1x128xf32, #tpu.memory_space<any>> -> memref<128xf32, #tpu.memory_space<any>>
      %c0_i32_17 = arith.constant 0 : i32
      %19 = tpu.memref_slice %arg5[%10, %c0_i32_17] : memref<128x128xf32, #tpu.memory_space<vmem>> -> memref<1x128xf32, #tpu.memory_space<vmem>>
      %20 = tpu.memref_squeeze %19 : memref<1x128xf32, #tpu.memory_space<vmem>> -> memref<128xf32, #tpu.memory_space<vmem>>
      %21 = tpu.memref_slice %arg7[%c0_i32_15] : memref<2x!tpu.dma_semaphore, #tpu.memory_space<semaphore_mem>> -> memref<1x!tpu.dma_semaphore, #tpu.memory_space<semaphore_mem>>
      %22 = tpu.memref_squeeze %21 : memref<1x!tpu.dma_semaphore, #tpu.memory_space<semaphore_mem>> -> memref<!tpu.dma_semaphore, #tpu.memory_space<semaphore_mem>>
      tpu.enqueue_dma source(%18 : memref<128xf32, #tpu.memory_space<any>>) target(%20 : memref<128xf32, #tpu.memory_space<vmem>>) target_semaphore(%22 : memref<!tpu.dma_semaphore, #tpu.memory_space<semaphore_mem>>)
      %c1_i32_18 = arith.constant 1 : i32
      %c0_i32_19 = arith.constant 0 : i32
      %23 = tpu.memref_slice %arg3[%16, %c0_i32_19] : memref<150x128xf32, #tpu.memory_space<any>> -> memref<1x128xf32, #tpu.memory_space<any>>
      %24 = tpu.memref_squeeze %23 : memref<1x128xf32, #tpu.memory_space<any>> -> memref<128xf32, #tpu.memory_space<any>>
      %c0_i32_20 = arith.constant 0 : i32
      %25 = tpu.memref_slice %arg6[%10, %c0_i32_20] : memref<128x128xf32, #tpu.memory_space<vmem>> -> memref<1x128xf32, #tpu.memory_space<vmem>>
      %26 = tpu.memref_squeeze %25 : memref<1x128xf32, #tpu.memory_space<vmem>> -> memref<128xf32, #tpu.memory_space<vmem>>
      %27 = tpu.memref_slice %arg7[%c1_i32_18] : memref<2x!tpu.dma_semaphore, #tpu.memory_space<semaphore_mem>> -> memref<1x!tpu.dma_semaphore, #tpu.memory_space<semaphore_mem>>
      %28 = tpu.memref_squeeze %27 : memref<1x!tpu.dma_semaphore, #tpu.memory_space<semaphore_mem>> -> memref<!tpu.dma_semaphore, #tpu.memory_space<semaphore_mem>>
      tpu.enqueue_dma source(%24 : memref<128xf32, #tpu.memory_space<any>>) target(%26 : memref<128xf32, #tpu.memory_space<vmem>>) target_semaphore(%28 : memref<!tpu.dma_semaphore, #tpu.memory_space<semaphore_mem>>)
    }
    %c128_i32_1 = arith.constant 128 : i32
    %c0_i32_2 = arith.constant 0 : i32
    %c128_i32_3 = arith.constant 128 : i32
    %2 = arith.addi %c0_i32_2, %c128_i32_3 : i32
    %c1_i32_4 = arith.constant 1 : i32
    scf.for %arg8 = %c0_i32_2 to %2 step %c1_i32_4  : i32 {
      %c1_i32_12 = arith.constant 1 : i32
      %9 = arith.muli %arg8, %c1_i32_12 : i32
      %c0_i32_13 = arith.constant 0 : i32
      %10 = arith.addi %c0_i32_13, %9 : i32
      %c0_i32_14 = arith.constant 0 : i32
      %c0_i32_15 = arith.constant 0 : i32
      %c0_i32_16 = arith.constant 0 : i32
      %11 = tpu.memref_slice %arg2[%c0_i32_14, %c0_i32_16] : memref<200x128xf32, #tpu.memory_space<any>> -> memref<1x128xf32, #tpu.memory_space<any>>
      %12 = tpu.memref_squeeze %11 : memref<1x128xf32, #tpu.memory_space<any>> -> memref<128xf32, #tpu.memory_space<any>>
      %c0_i32_17 = arith.constant 0 : i32
      %13 = tpu.memref_slice %arg5[%10, %c0_i32_17] : memref<128x128xf32, #tpu.memory_space<vmem>> -> memref<1x128xf32, #tpu.memory_space<vmem>>
      %14 = tpu.memref_squeeze %13 : memref<1x128xf32, #tpu.memory_space<vmem>> -> memref<128xf32, #tpu.memory_space<vmem>>
      %15 = tpu.memref_slice %arg7[%c0_i32_15] : memref<2x!tpu.dma_semaphore, #tpu.memory_space<semaphore_mem>> -> memref<1x!tpu.dma_semaphore, #tpu.memory_space<semaphore_mem>>
      %16 = tpu.memref_squeeze %15 : memref<1x!tpu.dma_semaphore, #tpu.memory_space<semaphore_mem>> -> memref<!tpu.dma_semaphore, #tpu.memory_space<semaphore_mem>>
      tpu.wait_dma2 semaphore(%16 : memref<!tpu.dma_semaphore, #tpu.memory_space<semaphore_mem>>) src(%12 : memref<128xf32, #tpu.memory_space<any>>) dst(%14 : memref<128xf32, #tpu.memory_space<vmem>>)
      %c0_i32_18 = arith.constant 0 : i32
      %c1_i32_19 = arith.constant 1 : i32
      %c0_i32_20 = arith.constant 0 : i32
      %17 = tpu.memref_slice %arg3[%c0_i32_18, %c0_i32_20] : memref<150x128xf32, #tpu.memory_space<any>> -> memref<1x128xf32, #tpu.memory_space<any>>
      %18 = tpu.memref_squeeze %17 : memref<1x128xf32, #tpu.memory_space<any>> -> memref<128xf32, #tpu.memory_space<any>>
      %c0_i32_21 = arith.constant 0 : i32
      %19 = tpu.memref_slice %arg6[%10, %c0_i32_21] : memref<128x128xf32, #tpu.memory_space<vmem>> -> memref<1x128xf32, #tpu.memory_space<vmem>>
      %20 = tpu.memref_squeeze %19 : memref<1x128xf32, #tpu.memory_space<vmem>> -> memref<128xf32, #tpu.memory_space<vmem>>
      %21 = tpu.memref_slice %arg7[%c1_i32_19] : memref<2x!tpu.dma_semaphore, #tpu.memory_space<semaphore_mem>> -> memref<1x!tpu.dma_semaphore, #tpu.memory_space<semaphore_mem>>
      %22 = tpu.memref_squeeze %21 : memref<1x!tpu.dma_semaphore, #tpu.memory_space<semaphore_mem>> -> memref<!tpu.dma_semaphore, #tpu.memory_space<semaphore_mem>>
      tpu.wait_dma2 semaphore(%22 : memref<!tpu.dma_semaphore, #tpu.memory_space<semaphore_mem>>) src(%18 : memref<128xf32, #tpu.memory_space<any>>) dst(%20 : memref<128xf32, #tpu.memory_space<vmem>>)
    }
    %c128_i32_5 = arith.constant 128 : i32
    %c0 = arith.constant 0 : index
    %c0_6 = arith.constant 0 : index
    %3 = vector.load %arg5[%c0, %c0_6] : memref<128x128xf32, #tpu.memory_space<vmem>>, vector<128x128xf32>
    %c0_7 = arith.constant 0 : index
    %c0_8 = arith.constant 0 : index
    %4 = vector.load %arg6[%c0_7, %c0_8] : memref<128x128xf32, #tpu.memory_space<vmem>>, vector<128x128xf32>
    %5 = arith.mulf %3, %4 : vector<128x128xf32>
    %cst = arith.constant dense<0.000000e+00> : vector<128xf32>
    %6 = vector.multi_reduction <add>, %5, %cst [1] : vector<128x128xf32> to vector<128xf32>
    %7 = vector.shape_cast %6 : vector<128xf32> to vector<1x1x128xf32>
    %c0_9 = arith.constant 0 : index
    %c0_10 = arith.constant 0 : index
    %c0_11 = arith.constant 0 : index
    %8 = vector.load %arg4[%c0_9, %c0_10, %c0_11] : memref<1x1x128xf32, #tpu.memory_space<vmem>>, vector<1x1x128xf32>
    tpu.vector_store %arg4[%c0_9, %c0_10, %c0_11], %7 {strides = array<i32>} : memref<1x1x128xf32, #tpu.memory_space<vmem>>, vector<1x1x128xf32>,
    return
  }
  func.func @transform_2(%arg0: i32, %arg1: memref<2x384xi32, #tpu.memory_space<smem>>) -> (i32, i32, i32) {
    %c0_i32 = arith.constant 0 : i32
    %c0_i32_0 = arith.constant 0 : i32
    %c0_i32_1 = arith.constant 0 : i32
    return %arg0, %c0_i32, %c0_i32_0 : i32, i32, i32
  }
}

</mosaic_0001>

<llo_original>
// kernel: tpu_custom_call.1
$region0: #{tpu_custom_call.1}
  #allocation0 [shape = 'u32[]', space=smem, size = 0x4, offset = 0x4, fixed_abs, tag = 'smem constant byte address 0x4 - core index']
  #allocation1 [shape = 'u32[144,128]{1,0:T(1,128)}', space=vmem, size = 0x12000, scoped, tag = 'internal scratch']
  #allocation2 [shape = 'f32[128,128]{1,0:T(8,128)}', space=vmem, size = 0x10000, scoped, tag = 'scratch operand']
  #allocation3 [shape = 'f32[128,128]{1,0:T(8,128)}', space=vmem, size = 0x10000, scoped, tag = 'scratch operand']
  #allocation4 [shape = 's32[2]{0}', space=sflag, size = 0x8, scoped, tag = 'scratch operand']
  #allocation5 [shape = 's32[1]{0}', space=sflag, size = 0x4, scoped, tag = 'scoped memory for tpu_custom_call.1']
  #allocation6 [shape = 'u8[3072]{0}', space=smem, size = 0xc00, scoped, tag = 'prefetched SMEM operand 0']
  #allocation9 [shape = 's32[]', space=sflag, size = 0x4, offset = 0, fixed_abs, tag = 'sflag constant byte address 0x0 - dummy sync flag']
  #allocation10 [shape = 's32[]', space=sflag, size = 0x4, offset = 0, fixed_abs, tag = 'sflag constant byte address 0x0 - dummy sync flag']
  #allocation11 [shape = 'u32[]', space=smem, size = 0x4, offset = 0x44, fixed_abs, tag = 'smem constant byte address 0x44 - assertion arg 0']
  #allocation12 [shape = 'u32[]', space=smem, size = 0x4, offset = 0x48, fixed_abs, tag = 'smem constant byte address 0x48 - assertion arg 1']
  #allocation13 [shape = 's32[]', space=sflag, size = 0x4, offset = 0, fixed_abs, tag = 'sflag constant byte address 0x0 - dummy sync flag']
  #allocation14 [shape = 's32[]', space=sflag, size = 0x4, offset = 0, fixed_abs, tag = 'sflag constant byte address 0x0 - dummy sync flag']
  %s0 = inlined_call_operand.hbm [shape: s32[2,384], index: 0, kind: input, shape index: {}]
  %s1 = inlined_call_operand.hbm [shape: f32[200,128], index: 1, kind: input, shape index: {}]
  %s2 = inlined_call_operand.hbm [shape: f32[150,128], index: 2, kind: input, shape index: {}]
  %s3 = inlined_call_operand.hbm [shape: f32[3,1,128], index: 3, kind: output, shape index: {}]
  %s4 = sld [smem:[#allocation0]]
  $region47: #{tpu_custom_call.1} parent=0
    _
  %s6 = ssub.s32 1, %s4
  %s7 = scalar_select 0, %s6, %s4
  %9 = dma.hbm_to_smem %s0, 96, [#allocation6], [#allocation5]
  %10 = dma.done [#allocation5], 96
  %11 = sfence
  $region1: #{tpu_custom_call.1} parent=0
    #allocation7 [shape = 'u8[1024]{0}', space=vmem, size = 0x400, scoped, tag = 'output window, operand 0']
    #allocation8 [shape = 's32[2]{0}', space=sflag, size = 0x8, scoped, tag = 'scoped memory for tpu_custom_call.1']
    %12 = vsyncpa [#allocation8], 0
    %s13 = scalar_lea.sflag [#allocation8], 1
    %14 = vsyncpa %s13, 0
    loop: start=0, step=1, limit=4
    $region2: #{tpu_custom_call.1} parent=1 // loop_pre_header
      _
    $region3: #{tpu_custom_call.1} parent=1 // loop_header
      %s16 = sphi 0, %s20
      %p17 = scmp.ge.s32.totalorder %s16, 4
      %s25 = sphi 0, %s27
      %s28 = sphi 0, %s25
      %s38 = sphi 0, %s28
    $region4: #{tpu_custom_call.1} parent=1 // loop_header_branch
      %19 = sbr.rel (%p17) target = $region8
    $region5: #{tpu_custom_call.1} parent=1 // loop_body
      %s21 = ssub.s32 %s16, 1
      %s22 = sadd.s32 %s16, 1
      %s23 = ssub.s32 %s16, %s22
      %p24 = scmp.eq.s32.totalorder %s23, 0
      %s26 = sadd.s32 %s25, 1
      %s27 = scalar_select %p24, %s25, %s26
      %p29 = pneg %p24
      %p30 = scmp.eq.s32.totalorder %s16, 2
      %p31 = por %p29, %p30
      %p32 = scmp.ne.s32.totalorder %s25, %s28
      %p33 = scmp.eq.s32.totalorder %s16, 0
      %p34 = por %p32, %p33
      %p35 = scmp.ne.s32.totalorder %s25, %s28
      %p36 = scmp.eq.s32.totalorder %s21, 2
      %p37 = por %p35, %p36
      %p39 = scmp.ne.s32.totalorder %s28, %s38
      %p40 = scmp.eq.s32.totalorder %s21, 0
      %p41 = por %p39, %p40
      %p42 = scmp.lt.s32.totalorder %s16, 3
      // Predicated region
      $region9: #{tpu_custom_call.1} parent=5 // pred_check
        %p43 = pneg %p42
      $region10: #{tpu_custom_call.1} parent=5 // pred_check_branch
        %45 = sbr.rel (%p43) target = $region12
      $region11: #{tpu_custom_call.1} parent=5 // pred_region
        %p46 = pneg %p34
        %p47 = pneg %p31
        %s48 = sand.u32 %s25, 1
        %s49 = scalar_lea.sflag [#allocation8], %s48
        %s50 = sand.u32 %s25, 1
        %s51 = scalar_lea.vmem [#allocation7], %s50
        %s52 = smul.u32 %s16, 128
        loop: start=0, step=1, limit=128
        $region13: #{tpu_custom_call.1} parent=11 // loop_pre_header
          _
        $region14: #{tpu_custom_call.1} parent=11 // loop_header
          %s54 = sphi 0, %s58
          %p55 = scmp.ge.s32.totalorder %s54, 128
        $region15: #{tpu_custom_call.1} parent=11 // loop_header_branch
          %57 = sbr.rel (%p55) target = $region19
        $region16: #{tpu_custom_call.1} parent=11 // loop_body
          %s59 = sadd.s32 %s52, %s54
          %s60 = sshra.s32 %s59, 7
          %s61 = sand.u32 %s59, 127
          %s62 = smul.u32 %s60, 256
          %s63 = sshra.s32 %s59, 7
          %s64 = sand.u32 %s59, 127
          %s65 = sadd.s32 %s62, %s64
          %s66 = sld [smem:[#allocation6 + %s65]]
          %s67 = sadd.s32 128, %s64
          %s68 = sadd.s32 %s62, %s67
          %s69 = sld [smem:[#allocation6 + %s68]]
          %s70 = smul.addr %s66, 16
          %s71 = scalar_lea.hbm %s1, %s70
          %s72 = scalar_lea.vmem [#allocation2], %s54
          // Predicated region
          $region20: #{tpu_custom_call.1} parent=16 // pred_check
            _
          $region21: #{tpu_custom_call.1} parent=16 // pred_check_branch
            %74 = sbr.rel target = $region23
          $region22: #{tpu_custom_call.1} parent=16 // pred_region
            %75 = sst [smem:[#allocation11]] [#allocation10]
            %76 = sst [smem:[#allocation12]] [#allocation9]
          $region23: #{tpu_custom_call.1} parent=16 // pred_fallthru
            _
          %78 = shalt.err (0)
          %s80 = sshll.u32 %s72, 4
          %s81 = int_to_ptr.vmem [resolvable:$true] %s80
          %83 = dma.hbm_to_vmem [thread:$0]  %s71, 16, %s81, [#allocation4]
          %s84 = smul.addr %s69, 16
          %s85 = scalar_lea.hbm %s2, %s84
          %s86 = scalar_lea.vmem [#allocation3], %s54
          %s87 = scalar_lea.sflag [#allocation4], 1
          // Predicated region
          $region24: #{tpu_custom_call.1} parent=16 // pred_check
            _
          $region25: #{tpu_custom_call.1} parent=16 // pred_check_branch
            %89 = sbr.rel target = $region27
          $region26: #{tpu_custom_call.1} parent=16 // pred_region
            %90 = sst [smem:[#allocation11]] [#allocation14]
            %91 = sst [smem:[#allocation12]] [#allocation13]
          $region27: #{tpu_custom_call.1} parent=16 // pred_fallthru
            _
          %93 = shalt.err (0)
          %s95 = sshll.u32 %s86, 4
          %s96 = int_to_ptr.vmem [resolvable:$true] %s95
          %98 = dma.hbm_to_vmem [thread:$0]  %s85, 16, %s96, %s87
        $region17: #{tpu_custom_call.1} parent=11 // loop_footer
          %s58 = sadd.s32 1, %s54
        $region18: #{tpu_custom_call.1} parent=11 // loop_footer_branch
          %53 = sbr.rel target = $region14
        $region19: #{tpu_custom_call.1} parent=11 // loop_exit
          _
        loop: start=0, step=1, limit=128
        $region28: #{tpu_custom_call.1} parent=11 // loop_pre_header
          _
        $region29: #{tpu_custom_call.1} parent=11 // loop_header
          %s100 = sphi 0, %s104
          %p101 = scmp.ge.s32.totalorder %s100, 128
        $region30: #{tpu_custom_call.1} parent=11 // loop_header_branch
          %103 = sbr.rel (%p101) target = $region34
        $region31: #{tpu_custom_call.1} parent=11 // loop_body
          %106 = dma.done [#allocation4], 16
          %s107 = scalar_lea.sflag [#allocation4], 1
          %109 = dma.done %s107, 16
        $region32: #{tpu_custom_call.1} parent=11 // loop_footer
          %s104 = sadd.s32 1, %s100
        $region33: #{tpu_custom_call.1} parent=11 // loop_footer_branch
          %99 = sbr.rel target = $region29
        $region34: #{tpu_custom_call.1} parent=11 // loop_exit
          _
        %v110 = vld [vmem:[#allocation2] sm:$0xff]
        %v111 = vld [vmem:[#allocation2 + $0x8] sm:$0xff]
        %v112 = vld [vmem:[#allocation2 + $0x10] sm:$0xff]
        %v113 = vld [vmem:[#allocation2 + $0x18] sm:$0xff]
        %v114 = vld [vmem:[#allocation2 + $0x20] sm:$0xff]
        %v115 = vld [vmem:[#allocation2 + $0x28] sm:$0xff]
        %v116 = vld [vmem:[#allocation2 + $0x30] sm:$0xff]
        %v117 = vld [vmem:[#allocation2 + $0x38] sm:$0xff]
        %v118 = vld [vmem:[#allocation2 + $0x40] sm:$0xff]
        %v119 = vld [vmem:[#allocation2 + $0x48] sm:$0xff]
        %v120 = vld [vmem:[#allocation2 + $0x50] sm:$0xff]
        %v121 = vld [vmem:[#allocation2 + $0x58] sm:$0xff]
        %v122 = vld [vmem:[#allocation2 + $0x60] sm:$0xff]
        %v123 = vld [vmem:[#allocation2 + $0x68] sm:$0xff]
        %v124 = vld [vmem:[#allocation2 + $0x70] sm:$0xff]
        %v125 = vld [vmem:[#allocation2 + $0x78] sm:$0xff]
        %v126 = vld [vmem:[#allocation3] sm:$0xff]
        %v127 = vld [vmem:[#allocation3 + $0x8] sm:$0xff]
        %v128 = vld [vmem:[#allocation3 + $0x10] sm:$0xff]
        %v129 = vld [vmem:[#allocation3 + $0x18] sm:$0xff]
        %v130 = vld [vmem:[#allocation3 + $0x20] sm:$0xff]
        %v131 = vld [vmem:[#allocation3 + $0x28] sm:$0xff]
        %v132 = vld [vmem:[#allocation3 + $0x30] sm:$0xff]
        %v133 = vld [vmem:[#allocation3 + $0x38] sm:$0xff]
        %v134 = vld [vmem:[#allocation3 + $0x40] sm:$0xff]
        %v135 = vld [vmem:[#allocation3 + $0x48] sm:$0xff]
        %v136 = vld [vmem:[#allocation3 + $0x50] sm:$0xff]
        %v137 = vld [vmem:[#allocation3 + $0x58] sm:$0xff]
        %v138 = vld [vmem:[#allocation3 + $0x60] sm:$0xff]
        %v139 = vld [vmem:[#allocation3 + $0x68] sm:$0xff]
        %v140 = vld [vmem:[#allocation3 + $0x70] sm:$0xff]
        %v141 = vld [vmem:[#allocation3 + $0x78] sm:$0xff]
        %v142 = vmul.f32 %v110, %v126
        %v143 = vmul.f32 %v111, %v127
        %v144 = vmul.f32 %v112, %v128
        %v145 = vmul.f32 %v113, %v129
        %v146 = vmul.f32 %v114, %v130
        %v147 = vmul.f32 %v115, %v131
        %v148 = vmul.f32 %v116, %v132
        %v149 = vmul.f32 %v117, %v133
        %v150 = vmul.f32 %v118, %v134
        %v151 = vmul.f32 %v119, %v135
        %v152 = vmul.f32 %v120, %v136
        %v153 = vmul.f32 %v121, %v137
        %v154 = vmul.f32 %v122, %v138
        %v155 = vmul.f32 %v123, %v139
        %v156 = vmul.f32 %v124, %v140
        %v157 = vmul.f32 %v125, %v141
        %158 = vadd.xlane.f32.xlu0 %v142
        %v159 = vpop.xlane.xlu0 %158
        %160 = vadd.xlane.f32.xlu0 %v143
        %v161 = vpop.xlane.xlu0 %160
        %162 = vadd.xlane.f32.xlu0 %v144
        %v163 = vpop.xlane.xlu0 %162
        %164 = vadd.xlane.f32.xlu0 %v145
        %v165 = vpop.xlane.xlu0 %164
        %166 = vadd.xlane.f32.xlu0 %v146
        %v167 = vpop.xlane.xlu0 %166
        %168 = vadd.xlane.f32.xlu0 %v147
        %v169 = vpop.xlane.xlu0 %168
        %170 = vadd.xlane.f32.xlu0 %v148
        %v171 = vpop.xlane.xlu0 %170
        %172 = vadd.xlane.f32.xlu0 %v149
        %v173 = vpop.xlane.xlu0 %172
        %174 = vadd.xlane.f32.xlu0 %v150
        %v175 = vpop.xlane.xlu0 %174
        %176 = vadd.xlane.f32.xlu0 %v151
        %v177 = vpop.xlane.xlu0 %176
        %178 = vadd.xlane.f32.xlu0 %v152
        %v179 = vpop.xlane.xlu0 %178
        %180 = vadd.xlane.f32.xlu0 %v153
        %v181 = vpop.xlane.xlu0 %180
        %182 = vadd.xlane.f32.xlu0 %v154
        %v183 = vpop.xlane.xlu0 %182
        %184 = vadd.xlane.f32.xlu0 %v155
        %v185 = vpop.xlane.xlu0 %184
        %186 = vadd.xlane.f32.xlu0 %v156
        %v187 = vpop.xlane.xlu0 %186
        %188 = vadd.xlane.f32.xlu0 %v157
        %v189 = vpop.xlane.xlu0 %188
        %v206 = vlaneseq
        %v207 = vand.u32 %v206, 127
        %v208 = vlaneseq
        %v209 = vshrl.u32 %v208, 7
        %v210 = vsub.s32 %v207, %v209
        %v211 = vrot.slane %v159, %v210
        %v212 = vadd.s32 %v207, 4294967288
        %v213 = vlaneseq
        %v214 = vshrl.u32 %v213, 7
        %v215 = vsub.s32 %v212, %v214
        %v216 = vrot.slane %v161, %v215
        %vm217 = vcmask 130112
        %v218 = vsel %vm217, %v216, %v211
        %v219 = vadd.s32 %v207, 4294967280
        %v220 = vlaneseq
        %v221 = vshrl.u32 %v220, 7
        %v222 = vsub.s32 %v219, %v221
        %v223 = vrot.slane %v163, %v222
        %vm224 = vcmask 195712
        %v225 = vsel %vm224, %v223, %v218
        %v226 = vadd.s32 %v207, 4294967272
        %v227 = vlaneseq
        %v228 = vshrl.u32 %v227, 7
        %v229 = vsub.s32 %v226, %v228
        %v230 = vrot.slane %v165, %v229
        %vm231 = vcmask 261312
        %v232 = vsel %vm231, %v230, %v225
        %v233 = vadd.s32 %v207, 4294967264
        %v234 = vlaneseq
        %v235 = vshrl.u32 %v234, 7
        %v236 = vsub.s32 %v233, %v235
        %v237 = vrot.slane %v167, %v236
        %vm238 = vcmask 326912
        %v239 = vsel %vm238, %v237, %v232
        %v240 = vadd.s32 %v207, 4294967256
        %v241 = vlaneseq
        %v242 = vshrl.u32 %v241, 7
        %v243 = vsub.s32 %v240, %v242
        %v244 = vrot.slane %v169, %v243
        %vm245 = vcmask 392512
        %v246 = vsel %vm245, %v244, %v239
        %v247 = vadd.s32 %v207, 4294967248
        %v248 = vlaneseq
        %v249 = vshrl.u32 %v248, 7
        %v250 = vsub.s32 %v247, %v249
        %v251 = vrot.slane %v171, %v250
        %vm252 = vcmask 458112
        %v253 = vsel %vm252, %v251, %v246
        %v254 = vadd.s32 %v207, 4294967240
        %v255 = vlaneseq
        %v256 = vshrl.u32 %v255, 7
        %v257 = vsub.s32 %v254, %v256
        %v258 = vrot.slane %v173, %v257
        %vm259 = vcmask 523712
        %v260 = vsel %vm259, %v258, %v253
        %v261 = vadd.s32 %v207, 4294967232
        %v262 = vlaneseq
        %v263 = vshrl.u32 %v262, 7
        %v264 = vsub.s32 %v261, %v263
        %v265 = vrot.slane %v175, %v264
        %vm266 = vcmask 589312
        %v267 = vsel %vm266, %v265, %v260
        %v268 = vadd.s32 %v207, 4294967224
        %v269 = vlaneseq
        %v270 = vshrl.u32 %v269, 7
        %v271 = vsub.s32 %v268, %v270
        %v272 = vrot.slane %v177, %v271
        %vm273 = vcmask 654912
        %v274 = vsel %vm273, %v272, %v267
        %v275 = vadd.s32 %v207, 4294967216
        %v276 = vlaneseq
        %v277 = vshrl.u32 %v276, 7
        %v278 = vsub.s32 %v275, %v277
        %v279 = vrot.slane %v179, %v278
        %vm280 = vcmask 720512
        %v281 = vsel %vm280, %v279, %v274
        %v282 = vadd.s32 %v207, 4294967208
        %v283 = vlaneseq
        %v284 = vshrl.u32 %v283, 7
        %v285 = vsub.s32 %v282, %v284
        %v286 = vrot.slane %v181, %v285
        %vm287 = vcmask 786112
        %v288 = vsel %vm287, %v286, %v281
        %v289 = vadd.s32 %v207, 4294967200
        %v290 = vlaneseq
        %v291 = vshrl.u32 %v290, 7
        %v292 = vsub.s32 %v289, %v291
        %v293 = vrot.slane %v183, %v292
        %vm294 = vcmask 851712
        %v295 = vsel %vm294, %v293, %v288
        %v296 = vadd.s32 %v207, 4294967192
        %v297 = vlaneseq
        %v298 = vshrl.u32 %v297, 7
        %v299 = vsub.s32 %v296, %v298
        %v300 = vrot.slane %v185, %v299
        %vm301 = vcmask 917312
        %v302 = vsel %vm301, %v300, %v295
        %v303 = vadd.s32 %v207, 4294967184
        %v304 = vlaneseq
        %v305 = vshrl.u32 %v304, 7
        %v306 = vsub.s32 %v303, %v305
        %v307 = vrot.slane %v187, %v306
        %vm308 = vcmask 982912
        %v309 = vsel %vm308, %v307, %v302
        %v310 = vadd.s32 %v207, 4294967176
        %v311 = vlaneseq
        %v312 = vshrl.u32 %v311, 7
        %v313 = vsub.s32 %v310, %v312
        %v314 = vrot.slane %v189, %v313
        %vm315 = vcmask 1048512
        %v316 = vsel %vm315, %v314, %v309
        %318 = vst [vmem:[%s51] sm:$0x1] %v316
        %s319 = sand.u32 %s25, 1
        %s320 = scalar_lea.sflag [#allocation8], %s319
        %s321 = sand.u32 %s25, 1
        %s322 = scalar_lea.vmem [#allocation7], %s321
        // Predicated region
        $region35: #{tpu_custom_call.1} parent=11 // pred_check
          %p323 = pneg %p31
        $region36: #{tpu_custom_call.1} parent=11 // pred_check_branch
          %325 = sbr.rel (%p323) target = $region38
        $region37: #{tpu_custom_call.1} parent=11 // pred_region
          %s327 = ssub.s32 16, 16
          %328 = vsyncadd %s320, %s327
          %s329 = smul.addr %s16, 16
          %s330 = scalar_lea.hbm %s3, %s329
          %s332 = sshll.u32 %s322, 4
          %s333 = int_to_ptr.vmem [resolvable:$true] %s332
          %335 = dma.vmem_to_hbm [thread:$0]  %s333, 16, %s330, %s320
        $region38: #{tpu_custom_call.1} parent=11 // pred_fallthru
          _
      $region12: #{tpu_custom_call.1} parent=5 // pred_fallthru
        _
      %p336 = scmp.le.s32.totalorder 1, %s16
      // Predicated region
      $region39: #{tpu_custom_call.1} parent=5 // pred_check
        %p337 = pneg %p336
      $region40: #{tpu_custom_call.1} parent=5 // pred_check_branch
        %339 = sbr.rel (%p337) target = $region42
      $region41: #{tpu_custom_call.1} parent=5 // pred_region
        %s340 = ssub.s32 %s16, 1
        // Predicated region
        $region43: #{tpu_custom_call.1} parent=41 // pred_check
          %p341 = pneg %p37
        $region44: #{tpu_custom_call.1} parent=41 // pred_check_branch
          %343 = sbr.rel (%p341) target = $region46
        $region45: #{tpu_custom_call.1} parent=41 // pred_region
          %s344 = sand.u32 %s28, 1
          %s345 = scalar_lea.sflag [#allocation8], %s344
          %s346 = sand.u32 %s28, 1
          %s347 = scalar_lea.vmem [#allocation7], %s346
          %348 = dma.done %s345, 16
        $region46: #{tpu_custom_call.1} parent=41 // pred_fallthru
          _
      $region42: #{tpu_custom_call.1} parent=5 // pred_fallthru
        _
    $region6: #{tpu_custom_call.1} parent=1 // loop_footer
      %s20 = sadd.s32 1, %s16
    $region7: #{tpu_custom_call.1} parent=1 // loop_footer_branch
      %15 = sbr.rel target = $region3
    $region8: #{tpu_custom_call.1} parent=1 // loop_exit
      _
    %349 = vsyncpa [#allocation8], 1
    %s350 = scalar_lea.sflag [#allocation8], 1
    %351 = vsyncpa %s350, 1
  %352 = vsyncmov [#allocation4]
  %s353 = vpop.sfrf %352
  %p354 = scmp.eq.s32.totalorder %s353, 0
  %p355 = pneg %p354
  %357 = shalt.err (%p355)
  %s358 = scalar_lea.sflag [#allocation4], 1
  %359 = vsyncmov %s358
  %s360 = vpop.sfrf %359
  %p361 = scmp.eq.s32.totalorder %s360, 0
  %p362 = pneg %p361
  %364 = shalt.err (%p362)

</llo_original>
